<compile_context>
chip_gen: v5e
topology: v5e:2x2
jax: 0.10.0
libtpu: 0.0.40
codegen_flags: <defaults>
</compile_context>

<pallas_src>
import functools

import jax
import jax.numpy as jnp
from jax import lax
from jax.experimental import pallas as pl
from jax.experimental.pallas import tpu as pltpu

_EPS = 1e-5


def _round_up(x, m):
    return ((x + m - 1) // m) * m


def _weighted_bce(p, t, *, c_pos, c_neg, one_plus_eps):
    # loss = -((1-a)*t*log(p+eps) + a*(1-t)*log(1-p+eps))
    # with pre-negated constants and the second log argument reassociated to a
    # single subtraction to save VALU ops (binding slot on v7x).
    return (c_pos * t * jnp.log(p + _EPS)
            + c_neg * (1.0 - t) * jnp.log(one_plus_eps - p))


def _bce_reduce_kernel(p_ref, t_ref, out_ref, acc_ref, *, c_pos, c_neg,
                       one_plus_eps, inner, ntiles, total, tr, ncols,
                       mask_tail, has_dead_steps):
    """Per-shard partial sum.  Grid = (n_shards, inner); inner is the
    reduction axis.  Accumulator is block-shaped so steady state is VPU-only;
    the scalar reduce happens once per shard in the epilogue."""
    s = pl.program_id(0)
    j = pl.program_id(1)
    blk = s * inner + j

    @pl.when(j == 0)
    def _init():
        acc_ref[...] = jnp.zeros_like(acc_ref)

    def _accumulate():
        p = p_ref[...].astype(jnp.float32)
        t = t_ref[...].astype(jnp.float32)
        loss = _weighted_bce(p, t, c_pos=c_pos, c_neg=c_neg,
                             one_plus_eps=one_plus_eps)
        if mask_tail:
            # Only the last block can contain out-of-range elements; mask them
            # there and use the cheap unmasked add everywhere else.
            @pl.when(blk != ntiles - 1)
            def _full():
                acc_ref[...] += loss

            @pl.when(blk == ntiles - 1)
            def _masked():
                rows = lax.broadcasted_iota(jnp.int32, loss.shape, 0)
                cols = lax.broadcasted_iota(jnp.int32, loss.shape, 1)
                flat = (blk * tr + rows) * ncols + cols
                acc_ref[...] += jnp.where(flat < total, loss, 0.0)
        else:
            acc_ref[...] += loss

    if has_dead_steps:
        # Odd ntiles split across 2 shards: the final step of the last shard
        # maps (clamped) to an already-processed block; skip it.
        pl.when(blk < ntiles)(_accumulate)
    else:
        _accumulate()

    @pl.when(j == pl.num_programs(1) - 1)
    def _fin():
        out_ref[...] = jnp.sum(acc_ref[...]).reshape(1, 1, 1)


def _bce_elementwise_kernel(p_ref, t_ref, o_ref, *, c_pos, c_neg,
                            one_plus_eps):
    p = p_ref[...].astype(jnp.float32)
    t = t_ref[...].astype(jnp.float32)
    loss = _weighted_bce(p, t, c_pos=c_pos, c_neg=c_neg,
                         one_plus_eps=one_plus_eps)
    o_ref[...] = loss.astype(o_ref.dtype)


def bce_with_weight(predict, target, *, alpha=0.7, reduction="mean",
                    tile_rows=1024):
    """Pallas TPU implementation of BCE_WITH_WEIGHT.forward."""
    assert predict.shape == target.shape
    orig_shape = predict.shape
    total = 1
    for d in orig_shape:
        total *= int(d)

    out_dtype = jnp.promote_types(predict.dtype, target.dtype)
    c_pos = float(alpha) - 1.0          # == -(1 - alpha)
    c_neg = -float(alpha)
    one_plus_eps = 1.0 + _EPS
    is_reduce = reduction in ("mean", "sum")

    # Lane-dense slab width: prefer one that divides `total` exactly so the
    # reshape is free and no pad copy is needed.
    if total >= 8 * 512:
        ncols = None
        for c in (512, 256, 128):
            if total % c == 0:
                ncols = c
                break
        if ncols is None:
            ncols = 512
    else:
        ncols = 128

    padded_total = _round_up(total, ncols)
    pad = padded_total - total
    nrows = padded_total // ncols

    # Minimum sublane tile per dtype: f32 -> 8, bf16 -> 16, int8/fp8 -> 32.
    min_sub = 8
    dts = [predict.dtype, target.dtype] + ([] if is_reduce else [out_dtype])
    for dt in dts:
        min_sub = max(min_sub, 32 // jnp.dtype(dt).itemsize)

    tr = _round_up(min(int(tile_rows), nrows), min_sub)
    ntiles = pl.cdiv(nrows, tr)

    p2 = predict.reshape(-1)
    t2 = target.reshape(-1)
    if pad:
        # TODO(synk): a truly ragged `total` still pays one zero-pad copy so
        # the flat array can be viewed as a 2-D slab; the pad value itself is
        # irrelevant because out-of-range elements are masked in-kernel.
        p2 = jnp.pad(p2, (0, pad))
        t2 = jnp.pad(t2, (0, pad))
    p2 = p2.reshape(nrows, ncols)
    t2 = t2.reshape(nrows, ncols)

    p_bytes = total * jnp.dtype(predict.dtype).itemsize
    t_bytes = total * jnp.dtype(target.dtype).itemsize

    if is_reduce:
        # 2-way shard of the reduction for multi-TC chips (v7x megacore); on
        # single-TC chips the only cost is (at most) one dead grid step.
        n_shards = 2 if ntiles >= 8 else 1
        inner = pl.cdiv(ntiles, n_shards)
        has_dead_steps = (n_shards * inner != ntiles)
        mask_tail = (ntiles * tr * ncols != total)

        if has_dead_steps:
            def in_map(s, j):
                return (jnp.minimum(s * inner + j, ntiles - 1), 0)
        else:
            def in_map(s, j):
                return (s * inner + j, 0)

        in_spec = pl.BlockSpec((tr, ncols), in_map)
        kernel = functools.partial(
            _bce_reduce_kernel, c_pos=c_pos, c_neg=c_neg,
            one_plus_eps=one_plus_eps, inner=inner, ntiles=ntiles,
            total=total, tr=tr, ncols=ncols, mask_tail=mask_tail,
            has_dead_steps=has_dead_steps)

        out = pl.pallas_call(
            kernel,
            out_shape=jax.ShapeDtypeStruct((n_shards, 1, 1), jnp.float32),
            grid_spec=pltpu.PrefetchScalarGridSpec(
                num_scalar_prefetch=0,
                grid=(n_shards, inner),
                in_specs=[in_spec, in_spec],
                out_specs=pl.BlockSpec((1, 1, 1), lambda s, j: (s, 0, 0)),
                scratch_shapes=[pltpu.VMEM((tr, ncols), jnp.float32)],
            ),
            compiler_params=pltpu.CompilerParams(
                dimension_semantics=("parallel", "arbitrary")),
            cost_estimate=pl.CostEstimate(
                flops=7 * total, transcendentals=2 * total,
                bytes_accessed=p_bytes + t_bytes + 4 * n_shards),
        )(p2, t2)
        total_sum = jnp.sum(out)          # n_shards tiny partials
        if reduction == "mean":
            total_sum = total_sum / jnp.float32(total)
        return total_sum.astype(out_dtype)
    else:  # reduction == 'none' (or anything else): elementwise loss
        tile_spec = pl.BlockSpec((tr, ncols), lambda i: (i, 0))
        out = pl.pallas_call(
            functools.partial(_bce_elementwise_kernel, c_pos=c_pos,
                              c_neg=c_neg, one_plus_eps=one_plus_eps),
            out_shape=jax.ShapeDtypeStruct((nrows, ncols), out_dtype),
            grid_spec=pltpu.PrefetchScalarGridSpec(
                num_scalar_prefetch=0,
                grid=(ntiles,),
                in_specs=[tile_spec, tile_spec],
                out_specs=tile_spec,
            ),
            compiler_params=pltpu.CompilerParams(
                dimension_semantics=("parallel",)),
            cost_estimate=pl.CostEstimate(
                flops=7 * total, transcendentals=2 * total,
                bytes_accessed=(p_bytes + t_bytes
                                + total * jnp.dtype(out_dtype).itemsize)),
        )(p2, t2)
        if pad:
            return out.reshape(-1)[:total].reshape(orig_shape)
        return out.reshape(orig_shape)


def _reference(predict, target, alpha=0.7, reduction="mean"):
    loss = -((1 - alpha) * target * jnp.log(predict + _EPS)
             + alpha * (1 - target) * jnp.log(1 - predict + _EPS))
    if reduction == "mean":
        return jnp.mean(loss)
    elif reduction == "sum":
        return jnp.sum(loss)
    return loss


def _check(shape, key, **kw):
    kp, kt = jax.random.split(key)
    predict = jax.random.uniform(kp, shape, dtype=jnp.float32,
                                 minval=0.01, maxval=0.99)
    target = (jax.random.uniform(kt, shape, dtype=jnp.float32) > 0.5).astype(
        jnp.float32)

    loss_mean = bce_with_weight(predict, target, alpha=0.7, reduction="mean",
                                **kw)
    loss_sum = bce_with_weight(predict, target, alpha=0.7, reduction="sum",
                               **kw)
    loss_none = bce_with_weight(predict, target, alpha=0.7, reduction="none",
                                **kw)
    jax.block_until_ready((loss_mean, loss_sum, loss_none))

    ref_mean = _reference(predict, target, 0.7, "mean")
    ref_sum = _reference(predict, target, 0.7, "sum")
    ref_none = _reference(predict, target, 0.7, "none")

    assert loss_none.shape == shape
    assert jnp.allclose(loss_mean, ref_mean, rtol=1e-4, atol=1e-5), (
        loss_mean, ref_mean)
    assert jnp.allclose(loss_sum, ref_sum, rtol=1e-4, atol=1e-3), (
        loss_sum, ref_sum)
    assert jnp.allclose(loss_none, ref_none, rtol=1e-4, atol=1e-4)


if __name__ == "__main__":
    key = jax.random.PRNGKey(0)
    k1, k2 = jax.random.split(key)

    # Primary case: NCHW probabilities + binary labels (aligned, zero-copy).
    _check((2, 4, 16, 16), k1)

    # Secondary case: ragged size -> exercises in-kernel tail masking and the
    # row-partial last block with small tiles.
    _check((3, 5, 7, 11), k2, tile_rows=8)

    print("KERNEL_OK")
</pallas_src>

<mosaic_0001>
module attributes {stable_mosaic.version = 11 : i64} {
  func.func @_bce_reduce_kernel(%arg0: i32, %arg1: i32, %arg2: memref<16x128xf32, #tpu.memory_space<vmem>>, %arg3: memref<16x128xf32, #tpu.memory_space<vmem>>, %arg4: memref<1x1x1xf32, #tpu.memory_space<vmem>>, %arg5: memref<16x128xf32, #tpu.memory_space<vmem>>) attributes {dimension_semantics = [#tpu.dimension_semantics<parallel>, #tpu.dimension_semantics<arbitrary>], iteration_bounds = array<i64: 1, 1>, scalar_prefetch = 0 : i64, scratch_operands = 1 : i64, tpu.core_type = #tpu.core_type<tc>, window_params = [{transform_indices = @transform_0, window_bounds = array<i64: 16, 128>}, {transform_indices = @transform_1, window_bounds = array<i64: 16, 128>}, {transform_indices = @transform_2, window_bounds = array<i64: 1, 1, 1>}]} {
    %c0_i32 = arith.constant 0 : i32
    %0 = arith.cmpi eq, %arg1, %c0_i32 : i32
    %1 = arith.extui %0 : i1 to i32
    %c0_i32_0 = arith.constant 0 : i32
    %2 = arith.cmpi ne, %1, %c0_i32_0 : i32
    scf.if %2 {
      %cst_14 = arith.constant 0.000000e+00 : f32
      %26 = vector.broadcast %cst_14 : f32 to vector<16x128xf32>
      %c0_15 = arith.constant 0 : index
      %c0_16 = arith.constant 0 : index
      %27 = vector.load %arg5[%c0_15, %c0_16] : memref<16x128xf32, #tpu.memory_space<vmem>>, vector<16x128xf32>
      tpu.vector_store %arg5[%c0_15, %c0_16], %26 {strides = array<i32>} : memref<16x128xf32, #tpu.memory_space<vmem>>, vector<16x128xf32>,
    } else {
    }
    %c0 = arith.constant 0 : index
    %c0_1 = arith.constant 0 : index
    %3 = vector.load %arg2[%c0, %c0_1] : memref<16x128xf32, #tpu.memory_space<vmem>>, vector<16x128xf32>
    %c0_2 = arith.constant 0 : index
    %c0_3 = arith.constant 0 : index
    %4 = vector.load %arg3[%c0_2, %c0_3] : memref<16x128xf32, #tpu.memory_space<vmem>>, vector<16x128xf32>
    %cst = arith.constant -3.000000e-01 : f32
    %5 = vector.broadcast %cst : f32 to vector<16x128xf32>
    %6 = arith.mulf %5, %4 : vector<16x128xf32>
    %cst_4 = arith.constant 9.99999974E-6 : f32
    %7 = vector.broadcast %cst_4 : f32 to vector<16x128xf32>
    %8 = arith.addf %3, %7 : vector<16x128xf32>
    %9 = math.log %8 : vector<16x128xf32>
    %10 = arith.mulf %6, %9 : vector<16x128xf32>
    %cst_5 = arith.constant 1.000000e+00 : f32
    %11 = vector.broadcast %cst_5 : f32 to vector<16x128xf32>
    %12 = arith.subf %11, %4 : vector<16x128xf32>
    %cst_6 = arith.constant -0.699999988 : f32
    %13 = vector.broadcast %cst_6 : f32 to vector<16x128xf32>
    %14 = arith.mulf %13, %12 : vector<16x128xf32>
    %cst_7 = arith.constant 1.000010e+00 : f32
    %15 = vector.broadcast %cst_7 : f32 to vector<16x128xf32>
    %16 = arith.subf %15, %3 : vector<16x128xf32>
    %17 = math.log %16 : vector<16x128xf32>
    %18 = arith.mulf %14, %17 : vector<16x128xf32>
    %19 = arith.addf %10, %18 : vector<16x128xf32>
    %c0_8 = arith.constant 0 : index
    %c0_9 = arith.constant 0 : index
    %20 = vector.load %arg5[%c0_8, %c0_9] : memref<16x128xf32, #tpu.memory_space<vmem>>, vector<16x128xf32>
    %21 = arith.addf %20, %19 : vector<16x128xf32>
    %c0_10 = arith.constant 0 : index
    %c0_11 = arith.constant 0 : index
    %22 = vector.load %arg5[%c0_10, %c0_11] : memref<16x128xf32, #tpu.memory_space<vmem>>, vector<16x128xf32>
    tpu.vector_store %arg5[%c0_10, %c0_11], %21 {strides = array<i32>} : memref<16x128xf32, #tpu.memory_space<vmem>>, vector<16x128xf32>,
    %c0_i32_12 = arith.constant 0 : i32
    %23 = arith.cmpi eq, %arg1, %c0_i32_12 : i32
    %24 = arith.extui %23 : i1 to i32
    %c0_i32_13 = arith.constant 0 : i32
    %25 = arith.cmpi ne, %24, %c0_i32_13 : i32
    scf.if %25 {
      %c0_14 = arith.constant 0 : index
      %c0_15 = arith.constant 0 : index
      %26 = vector.load %arg5[%c0_14, %c0_15] : memref<16x128xf32, #tpu.memory_space<vmem>>, vector<16x128xf32>
      %27 = vector.shape_cast %26 : vector<16x128xf32> to vector<1x16x128xf32>
      %cst_16 = arith.constant dense<0.000000e+00> : vector<1xf32>
      %28 = vector.multi_reduction <add>, %27, %cst_16 [1, 2] : vector<1x16x128xf32> to vector<1xf32>
      %29 = vector.shape_cast %28 : vector<1xf32> to vector<1x1x1xf32>
      %30 = vector.extract %29[0, 0, 0] : f32 from vector<1x1x1xf32>
      %31 = vector.broadcast %30 : f32 to vector<1x1x1xf32>
      %c0_17 = arith.constant 0 : index
      %c0_18 = arith.constant 0 : index
      %c0_19 = arith.constant 0 : index
      %32 = vector.load %arg4[%c0_17, %c0_18, %c0_19] : memref<1x1x1xf32, #tpu.memory_space<vmem>>, vector<1x1x1xf32>
      tpu.vector_store %arg4[%c0_17, %c0_18, %c0_19], %31 {strides = array<i32>} : memref<1x1x1xf32, #tpu.memory_space<vmem>>, vector<1x1x1xf32>,
    } else {
    }
    return
  }
  func.func @transform_0(%arg0: i32, %arg1: i32) -> (i32, i32) {
    %c1_i32 = arith.constant 1 : i32
    %0 = arith.muli %arg0, %c1_i32 : i32
    %1 = arith.addi %0, %arg1 : i32
    %c0_i32 = arith.constant 0 : i32
    %c0_i32_0 = arith.constant 0 : i32
    return %1, %c0_i32 : i32, i32
  }
  func.func @transform_1(%arg0: i32, %arg1: i32) -> (i32, i32) {
    %c1_i32 = arith.constant 1 : i32
    %0 = arith.muli %arg0, %c1_i32 : i32
    %1 = arith.addi %0, %arg1 : i32
    %c0_i32 = arith.constant 0 : i32
    %c0_i32_0 = arith.constant 0 : i32
    return %1, %c0_i32 : i32, i32
  }
  func.func @transform_2(%arg0: i32, %arg1: i32) -> (i32, i32, i32) {
    %c0_i32 = arith.constant 0 : i32
    %c0_i32_0 = arith.constant 0 : i32
    %c0_i32_1 = arith.constant 0 : i32
    return %arg0, %c0_i32, %c0_i32_0 : i32, i32, i32
  }
}

</mosaic_0001>

<llo_original>
// kernel: tpu_custom_call.1
$region0: #{tpu_custom_call.1}
  #allocation0 [shape = 'u32[]', space=smem, size = 0x4, offset = 0x4, fixed_abs, tag = 'smem constant byte address 0x4 - core index']
  #allocation1 [shape = 'u32[72,128]{1,0:T(1,128)}', space=vmem, size = 0x9000, scoped, tag = 'internal scratch']
  #allocation2 [shape = 'f32[16,128]{1,0:T(8,128)}', space=vmem, size = 0x2000, scoped, tag = 'scratch operand']
  %s0 = inlined_call_operand.hbm [shape: f32[16,128], index: 0, kind: input, shape index: {}]
  %s1 = inlined_call_operand.hbm [shape: f32[16,128], index: 1, kind: input, shape index: {}]
  %s2 = inlined_call_operand.hbm [shape: f32[1,1,1], index: 2, kind: output, shape index: {}]
  %s3 = sld [smem:[#allocation0]]
  $region34: #{tpu_custom_call.1} parent=0
    _
  %s5 = ssub.s32 1, %s3
  %s6 = scalar_select 0, %s5, %s3
  $region1: #{tpu_custom_call.1} parent=0
    #allocation3 [shape = 'u8[8192]{0}', space=vmem, size = 0x2000, scoped, tag = 'input window, operand 0, single buffered']
    #allocation4 [shape = 's32[1]{0}', space=sflag, size = 0x4, scoped, tag = 'scoped memory for tpu_custom_call.1']
    #allocation5 [shape = 's32[1]{0}', space=sflag, size = 0x4, scoped, tag = 'scoped memory for tpu_custom_call.1']
    #allocation6 [shape = 'u8[8192]{0}', space=vmem, size = 0x2000, scoped, tag = 'input window, operand 1, single buffered']
    #allocation7 [shape = 's32[1]{0}', space=sflag, size = 0x4, scoped, tag = 'scoped memory for tpu_custom_call.1']
    #allocation8 [shape = 'u8[512]{0}', space=vmem, size = 0x400, scoped, tag = 'output window, operand 0, single buffered']
    %7 = vsyncpa [#allocation4], 0
    %8 = vsyncpa [#allocation7], 0
    %9 = vsyncpa [#allocation5], 0
    // Predicated region
    $region2: #{tpu_custom_call.1} parent=1 // pred_check
      _
    $region3: #{tpu_custom_call.1} parent=1 // pred_check_branch
      %11 = sbr.rel (0) target = $region5
    $region4: #{tpu_custom_call.1} parent=1 // pred_region
      %s12 = sadd.s32 0, 0
      %s13 = smul.u32 2, %s12
      %15 = vsyncadd [#allocation4], 0
      %s16 = smul.addr %s13, 8
      %s17 = scalar_lea.hbm %s0, %s16
      %s18 = sshll.u32 %s17, 4
      %s19 = int_to_ptr.hbm [resolvable:$true] %s18
      %s20 = sshll.u32 [#allocation3], 4
      %s21 = int_to_ptr.vmem [resolvable:$true] %s20
      %26 = dma.hbm_to_vmem [thread:$0]  %s19, 256, %s21, [#allocation4], 128, 128, 8
    $region5: #{tpu_custom_call.1} parent=1 // pred_fallthru
      _
    // Predicated region
    $region6: #{tpu_custom_call.1} parent=1 // pred_check
      _
    $region7: #{tpu_custom_call.1} parent=1 // pred_check_branch
      %28 = sbr.rel (0) target = $region9
    $region8: #{tpu_custom_call.1} parent=1 // pred_region
      %s29 = sadd.s32 0, 0
      %s30 = smul.u32 2, %s29
      %32 = vsyncadd [#allocation7], 0
      %s33 = smul.addr %s30, 8
      %s34 = scalar_lea.hbm %s1, %s33
      %s35 = sshll.u32 %s34, 4
      %s36 = int_to_ptr.hbm [resolvable:$true] %s35
      %s37 = sshll.u32 [#allocation6], 4
      %s38 = int_to_ptr.vmem [resolvable:$true] %s37
      %43 = dma.hbm_to_vmem [thread:$0]  %s36, 256, %s38, [#allocation7], 128, 128, 8
    $region9: #{tpu_custom_call.1} parent=1 // pred_fallthru
      _
    // Predicated region
    $region10: #{tpu_custom_call.1} parent=1 // pred_check
      _
    $region11: #{tpu_custom_call.1} parent=1 // pred_check_branch
      %45 = sbr.rel (0) target = $region13
    $region12: #{tpu_custom_call.1} parent=1 // pred_region
      %47 = dma.done [#allocation4], 256
    $region13: #{tpu_custom_call.1} parent=1 // pred_fallthru
      _
    // Predicated region
    $region14: #{tpu_custom_call.1} parent=1 // pred_check
      _
    $region15: #{tpu_custom_call.1} parent=1 // pred_check_branch
      %49 = sbr.rel (0) target = $region17
    $region16: #{tpu_custom_call.1} parent=1 // pred_region
      %51 = dma.done [#allocation7], 256
    $region17: #{tpu_custom_call.1} parent=1 // pred_fallthru
      _
    %s52 = sadd.s32 0, 0
    %s53 = smul.u32 2, %s52
    %s54 = sadd.s32 0, 0
    %s55 = smul.u32 2, %s54
    %p56 = scmp.eq.s32.totalorder 0, 0
    // Predicated region
    $region18: #{tpu_custom_call.1} parent=1 // pred_check
      %p57 = pneg %p56
    $region19: #{tpu_custom_call.1} parent=1 // pred_check_branch
      %59 = sbr.rel (%p57) target = $region21
    $region20: #{tpu_custom_call.1} parent=1 // pred_region
      %60 = vst [vmem:[#allocation2] sm:$0xff] 0.0
      %61 = vst [vmem:[#allocation2 + $0x8] sm:$0xff] 0.0
    $region21: #{tpu_custom_call.1} parent=1 // pred_fallthru
      _
    %v62 = vld [vmem:[#allocation3] sm:$0xff]
    %v63 = vld [vmem:[#allocation3 + $0x8] sm:$0xff]
    %v64 = vld [vmem:[#allocation6] sm:$0xff]
    %v65 = vld [vmem:[#allocation6 + $0x8] sm:$0xff]
    %v66 = vmul.f32 %v64, -0.3
    %v67 = vmul.f32 %v65, -0.3
    %v68 = vadd.f32 %v62, 1e-05
    %v69 = vadd.f32 %v63, 1e-05
    %v70 = vlog2.pop %v68
    %v71 = vmul.f32 %v70, 0.6931472
    %v72 = vlog2.pop %v69
    %v73 = vmul.f32 %v72, 0.6931472
    %v74 = vmul.f32 %v66, %v71
    %v75 = vmul.f32 %v67, %v73
    %v76 = vsub.f32 1.0, %v64
    %v77 = vsub.f32 1.0, %v65
    %v78 = vmul.f32 %v76, -0.7
    %v79 = vmul.f32 %v77, -0.7
    %v80 = vsub.f32 1.00001, %v62
    %v81 = vsub.f32 1.00001, %v63
    %v82 = vlog2.pop %v80
    %v83 = vmul.f32 %v82, 0.6931472
    %v84 = vlog2.pop %v81
    %v85 = vmul.f32 %v84, 0.6931472
    %v86 = vmul.f32 %v78, %v83
    %v87 = vmul.f32 %v79, %v85
    %v88 = vadd.f32 %v74, %v86
    %v89 = vadd.f32 %v75, %v87
    %v90 = vld [vmem:[#allocation2] sm:$0xff]
    %v91 = vld [vmem:[#allocation2 + $0x8] sm:$0xff]
    %v92 = vadd.f32 %v90, %v88
    %v93 = vadd.f32 %v91, %v89
    %94 = vst [vmem:[#allocation2] sm:$0xff] %v92
    %95 = vst [vmem:[#allocation2 + $0x8] sm:$0xff] %v93
    // Predicated region
    $region22: #{tpu_custom_call.1} parent=1 // pred_check
      %p96 = pneg %p56
    $region23: #{tpu_custom_call.1} parent=1 // pred_check_branch
      %98 = sbr.rel (%p96) target = $region25
    $region24: #{tpu_custom_call.1} parent=1 // pred_region
      %v99 = vld [vmem:[#allocation2] sm:$0xff]
      %v100 = vld [vmem:[#allocation2 + $0x8] sm:$0xff]
      %v101 = vadd.f32 %v99, %v100
      %102 = vadd.xlane.f32.xlu0 %v101
      %v103 = vpop.xlane.xlu0 %102
      %v104 = vrot.slane %v103, 4
      %v105 = vadd.f32 %v103, %v104
      %v106 = vrot.slane %v105, 2
      %v107 = vadd.f32 %v105, %v106
      %v108 = vrot.slane %v107, 1
      %v109 = vadd.f32 %v107, %v108
      %s110 = vtos %v109
      %v111 = vstv %s110
      %vm112 = vcmask 0
      %113 = vst.msk [vmem:[#allocation8] sm:$0x1] %vm112, %v111
    $region25: #{tpu_custom_call.1} parent=1 // pred_fallthru
      _
    // Predicated region
    $region26: #{tpu_custom_call.1} parent=1 // pred_check
      _
    $region27: #{tpu_custom_call.1} parent=1 // pred_check_branch
      %115 = sbr.rel (0) target = $region29
    $region28: #{tpu_custom_call.1} parent=1 // pred_region
      %117 = vsyncadd [#allocation5], 0
      %s119 = sshll.u32 [#allocation8], 4
      %s120 = int_to_ptr.vmem [resolvable:$true] %s119
      %s121 = sshll.u32 %s2, 4
      %s122 = int_to_ptr.hbm [resolvable:$true] %s121
      %124 = dma.vmem_to_hbm [thread:$0]  %s120, 16, %s122, [#allocation5]
    $region29: #{tpu_custom_call.1} parent=1 // pred_fallthru
      _
    // Predicated region
    $region30: #{tpu_custom_call.1} parent=1 // pred_check
      _
    $region31: #{tpu_custom_call.1} parent=1 // pred_check_branch
      %126 = sbr.rel (0) target = $region33
    $region32: #{tpu_custom_call.1} parent=1 // pred_region
      %128 = dma.done [#allocation5], 16
    $region33: #{tpu_custom_call.1} parent=1 // pred_fallthru
      _
    %129 = vsyncpa [#allocation4], 1
    %130 = vsyncpa [#allocation7], 1
    %131 = vsyncpa [#allocation5], 1

</llo_original>
